<compile_context>
chip_gen: v5e
topology: v5e:2x2
jax: 0.10.0
libtpu: 0.0.40
codegen_flags: <defaults>
</compile_context>

<pallas_src>
import jax
import jax.numpy as jnp
from jax import lax
from jax.experimental import pallas as pl
from jax.experimental.pallas import tpu as pltpu


def _round_up(x, m):
    return ((x + m - 1) // m) * m


def _embedding_dot_kernel(u_idx_ref, i_idx_ref, u_tab_ref, i_tab_ref, out_ref):
    """Scores R batch rows per grid step.

    u_idx_ref / i_idx_ref : (R, 1) int32 per-chunk index blocks (VMEM).
    u_tab_ref / i_tab_ref : full (padded) embedding tables, resident once in
                            VMEM (no pipelining -> single buffer).
    out_ref               : (1, 1, R) lane-dense f32 output slab for this chunk.
    """
    u_ids = u_idx_ref[...]                      # (R, 1) int32
    i_ids = i_idx_ref[...]                      # (R, 1) int32
    u_tab = u_tab_ref[...]                      # (NU_p, E_p) f32
    i_tab = i_tab_ref[...]                      # (NI_p, E_p) f32

    R = u_ids.shape[0]
    nu = u_tab.shape[0]
    ni = i_tab.shape[0]

    # Vectorized gather on the MXU: one-hot selectors built with a 2-D iota and
    # a full-tile compare, then matmul'd against the resident tables.  Exact in
    # f32 (selector entries are 0.0 / 1.0).  Out-of-range indices select no row
    # (score contribution 0) instead of faulting.
    onehot_u = (lax.broadcasted_iota(jnp.int32, (R, nu), 1) == u_ids).astype(jnp.float32)
    onehot_i = (lax.broadcasted_iota(jnp.int32, (R, ni), 1) == i_ids).astype(jnp.float32)

    u_rows = jnp.dot(onehot_u, u_tab, preferred_element_type=jnp.float32)   # (R, E_p)
    i_rows = jnp.dot(onehot_i, i_tab, preferred_element_type=jnp.float32)   # (R, E_p)

    prod = u_rows * i_rows                                    # full-tile VPU multiply
    scores = jnp.sum(prod, axis=-1, keepdims=True)            # (R, 1) lane reduction
    out_ref[...] = jnp.transpose(scores).reshape(1, 1, R)     # lane-dense (1, R) store


def embedding_dot_scores(user_indices, item_indices, user_emb, item_emb,
                         rows_per_chunk=256):
    """score[b] = dot(user_emb[user_indices[b]], item_emb[item_indices[b]])."""
    B = int(user_indices.shape[0])
    NU, E = user_emb.shape
    NI, Ei = item_emb.shape
    assert Ei == E
    R = int(rows_per_chunk)

    # Pad embedding dim to full 128-lane vregs and table rows to sublane
    # multiples (zero rows/cols never change the dot product).
    E_p = _round_up(max(E, 1), 128)
    NU_p = _round_up(max(NU, 1), 8)
    NI_p = _round_up(max(NI, 1), 8)

    u_tab = jnp.pad(jnp.asarray(user_emb, jnp.float32), ((0, NU_p - NU), (0, E_p - E)))
    i_tab = jnp.pad(jnp.asarray(item_emb, jnp.float32), ((0, NI_p - NI), (0, E_p - E)))

    # Pad the batch to a whole number of chunks (index 0 is valid; padded
    # scores are sliced off below).  Indices are shaped (B_p, 1) so each chunk
    # is one (R, 1) VMEM block.
    B_p = _round_up(max(B, 1), R)
    u_idx = jnp.pad(jnp.asarray(user_indices, jnp.int32), (0, B_p - B)).reshape(B_p, 1)
    i_idx = jnp.pad(jnp.asarray(item_indices, jnp.int32), (0, B_p - B)).reshape(B_p, 1)
    num_chunks = B_p // R

    # Hardware-aware VMEM limit: single-buffered tables + generous headroom for
    # the per-chunk intermediates, clamped below physical capacity (v7x: 64 MiB).
    table_bytes = 4 * (NU_p + NI_p) * E_p
    work_bytes = 4 * R * (4 * E_p + NU_p + NI_p) + (1 << 20)
    needed = table_bytes + work_bytes
    try:
        cap = int(getattr(pltpu.get_tpu_info(), "vmem_capacity_bytes", 64 << 20))
    except Exception:
        cap = 64 << 20
    vmem_limit = int(min(int(0.9 * cap), max(32 << 20, 2 * needed)))

    out = pl.pallas_call(
        _embedding_dot_kernel,
        out_shape=jax.ShapeDtypeStruct((num_chunks, 1, R), jnp.float32),
        grid=(num_chunks,),
        in_specs=[
            pl.BlockSpec((R, 1), lambda c: (c, 0)),
            pl.BlockSpec((R, 1), lambda c: (c, 0)),
            # Whole tables resident once in VMEM (single buffer, one DMA).
            pl.BlockSpec(memory_space=pltpu.MemorySpace.VMEM),
            pl.BlockSpec(memory_space=pltpu.MemorySpace.VMEM),
        ],
        out_specs=pl.BlockSpec((1, 1, R), lambda c: (c, 0, 0)),
        compiler_params=pltpu.CompilerParams(
            dimension_semantics=("parallel",),
            vmem_limit_bytes=vmem_limit,
        ),
    )(u_idx, i_idx, u_tab, i_tab)

    return out.reshape(-1)[:B]


if __name__ == "__main__":
    # Small deterministic setup consistent with Model(n_users, n_items, E)
    n_users, n_items, embedding_size, batch = 16, 24, 32, 8

    key = jax.random.PRNGKey(0)
    k_u, k_i, k_ui, k_ii = jax.random.split(key, 4)

    # Deterministic "parameters" (torch.nn.Embedding weights ~ N(0, 1))
    user_emb = jax.random.normal(k_u, (n_users, embedding_size), dtype=jnp.float32)
    item_emb = jax.random.normal(k_i, (n_items, embedding_size), dtype=jnp.float32)

    # Inputs: integer index vectors
    user_idx = jax.random.randint(k_ui, (batch,), 0, n_users, dtype=jnp.int32)
    item_idx = jax.random.randint(k_ii, (batch,), 0, n_items, dtype=jnp.int32)

    scores = embedding_dot_scores(user_idx, item_idx, user_emb, item_emb)
    scores = jax.block_until_ready(scores)

    # Pure-JAX reference check (same semantics as the PyTorch forward)
    ref = jnp.sum(user_emb[user_idx] * item_emb[item_idx], axis=-1)
    assert scores.shape == (batch,)
    assert jnp.allclose(scores, ref, atol=1e-5, rtol=1e-5)

    print("KERNEL_OK")
</pallas_src>

<mosaic_0001>
module attributes {stable_mosaic.version = 11 : i64} {
  func.func @_embedding_dot_kernel(%arg0: i32, %arg1: memref<256x1xi32, #tpu.memory_space<vmem>>, %arg2: memref<256x1xi32, #tpu.memory_space<vmem>>, %arg3: memref<16x128xf32, #tpu.memory_space<vmem>>, %arg4: memref<24x128xf32, #tpu.memory_space<vmem>>, %arg5: memref<1x1x256xf32, #tpu.memory_space<vmem>>) attributes {dimension_semantics = [#tpu.dimension_semantics<parallel>], iteration_bounds = array<i64: 1>, scalar_prefetch = 0 : i64, scratch_operands = 0 : i64, tpu.core_type = #tpu.core_type<tc>, window_params = [{transform_indices = @transform_0, window_bounds = array<i64: 256, 1>}, {transform_indices = @transform_1, window_bounds = array<i64: 256, 1>}, {pipeline_mode = #tpu.pipeline_mode<synchronous>, transform_indices = @transform_2, window_bounds = array<i64: 16, 128>}, {pipeline_mode = #tpu.pipeline_mode<synchronous>, transform_indices = @transform_3, window_bounds = array<i64: 24, 128>}, {transform_indices = @transform_4, window_bounds = array<i64: 1, 1, 256>}]} {
    %c0 = arith.constant 0 : index
    %c0_0 = arith.constant 0 : index
    %0 = vector.load %arg1[%c0, %c0_0] : memref<256x1xi32, #tpu.memory_space<vmem>>, vector<256x1xi32>
    %c0_1 = arith.constant 0 : index
    %c0_2 = arith.constant 0 : index
    %1 = vector.load %arg2[%c0_1, %c0_2] : memref<256x1xi32, #tpu.memory_space<vmem>>, vector<256x1xi32>
    %c0_3 = arith.constant 0 : index
    %c0_4 = arith.constant 0 : index
    %2 = vector.load %arg3[%c0_3, %c0_4] : memref<16x128xf32, #tpu.memory_space<vmem>>, vector<16x128xf32>
    %c0_5 = arith.constant 0 : index
    %c0_6 = arith.constant 0 : index
    %3 = vector.load %arg4[%c0_5, %c0_6] : memref<24x128xf32, #tpu.memory_space<vmem>>, vector<24x128xf32>
    %4 = tpu.iota {dimensions = array<i32: 1>} : vector<256x16xi32>
    %5 = vector.broadcast %0 : vector<256x1xi32> to vector<256x16xi32>
    %6 = arith.cmpi eq, %4, %5 : vector<256x16xi32>
    %7 = arith.extui %6 : vector<256x16xi1> to vector<256x16xi32>
    %8 = arith.sitofp %7 : vector<256x16xi32> to vector<256x16xf32>
    %9 = tpu.iota {dimensions = array<i32: 1>} : vector<256x24xi32>
    %10 = vector.broadcast %1 : vector<256x1xi32> to vector<256x24xi32>
    %11 = arith.cmpi eq, %9, %10 : vector<256x24xi32>
    %12 = arith.extui %11 : vector<256x24xi1> to vector<256x24xi32>
    %13 = arith.sitofp %12 : vector<256x24xi32> to vector<256x24xf32>
    %cst = arith.constant dense<0.000000e+00> : vector<256x128xf32>
    %14 = tpu.matmul %8, %2, %cst {dimension_numbers = #tpu.dot_dimension_numbers<[1], [0], [0], [1], [0, 0, 1, 1], [], []>} : vector<256x16xf32>, vector<16x128xf32>, vector<256x128xf32> -> vector<256x128xf32>
    %cst_7 = arith.constant dense<0.000000e+00> : vector<256x128xf32>
    %15 = tpu.matmul %13, %3, %cst_7 {dimension_numbers = #tpu.dot_dimension_numbers<[1], [0], [0], [1], [0, 0, 1, 1], [], []>} : vector<256x24xf32>, vector<24x128xf32>, vector<256x128xf32> -> vector<256x128xf32>
    %16 = arith.mulf %14, %15 : vector<256x128xf32>
    %cst_8 = arith.constant dense<0.000000e+00> : vector<256xf32>
    %17 = vector.multi_reduction <add>, %16, %cst_8 [1] : vector<256x128xf32> to vector<256xf32>
    %18 = vector.shape_cast %17 : vector<256xf32> to vector<256x1xf32>
    %19 = tpu.transpose %18, [1, 0] : vector<256x1xf32> -> vector<1x256xf32>
    %20 = vector.shape_cast %19 : vector<1x256xf32> to vector<1x1x256xf32>
    %c0_9 = arith.constant 0 : index
    %c0_10 = arith.constant 0 : index
    %c0_11 = arith.constant 0 : index
    %21 = vector.load %arg5[%c0_9, %c0_10, %c0_11] : memref<1x1x256xf32, #tpu.memory_space<vmem>>, vector<1x1x256xf32>
    tpu.vector_store %arg5[%c0_9, %c0_10, %c0_11], %20 {strides = array<i32>} : memref<1x1x256xf32, #tpu.memory_space<vmem>>, vector<1x1x256xf32>,
    return
  }
  func.func @transform_0(%arg0: i32) -> (i32, i32) {
    %c0_i32 = arith.constant 0 : i32
    %c0_i32_0 = arith.constant 0 : i32
    return %arg0, %c0_i32 : i32, i32
  }
  func.func @transform_1(%arg0: i32) -> (i32, i32) {
    %c0_i32 = arith.constant 0 : i32
    %c0_i32_0 = arith.constant 0 : i32
    return %arg0, %c0_i32 : i32, i32
  }
  func.func @transform_2(%arg0: i32) -> (i32, i32) {
    %c0_i32 = arith.constant 0 : i32
    %c0_i32_0 = arith.constant 0 : i32
    %c0_i32_1 = arith.constant 0 : i32
    return %c0_i32, %c0_i32_0 : i32, i32
  }
  func.func @transform_3(%arg0: i32) -> (i32, i32) {
    %c0_i32 = arith.constant 0 : i32
    %c0_i32_0 = arith.constant 0 : i32
    %c0_i32_1 = arith.constant 0 : i32
    return %c0_i32, %c0_i32_0 : i32, i32
  }
  func.func @transform_4(%arg0: i32) -> (i32, i32, i32) {
    %c0_i32 = arith.constant 0 : i32
    %c0_i32_0 = arith.constant 0 : i32
    %c0_i32_1 = arith.constant 0 : i32
    return %arg0, %c0_i32, %c0_i32_0 : i32, i32, i32
  }
}

</mosaic_0001>

<llo_original>
// kernel: tpu_custom_call.1
$region0: #{tpu_custom_call.1}
  #allocation0 [shape = 'u32[]', space=smem, size = 0x4, offset = 0x4, fixed_abs, tag = 'smem constant byte address 0x4 - core index']
  #allocation1 [shape = 'u32[72,128]{1,0:T(1,128)}', space=vmem, size = 0x9000, scoped, tag = 'internal scratch']
  %s0 = inlined_call_operand.vmem [shape: s32[256,1], index: 0, kind: input, shape index: {}]
  %s1 = inlined_call_operand.vmem [shape: s32[256,1], index: 1, kind: input, shape index: {}]
  %s2 = inlined_call_operand.vmem [shape: f32[16,128], index: 2, kind: input, shape index: {}]
  %s3 = inlined_call_operand.vmem [shape: f32[24,128], index: 3, kind: input, shape index: {}]
  %s4 = inlined_call_operand.hbm [shape: f32[1,1,256], index: 4, kind: output, shape index: {}]
  %s5 = sld [smem:[#allocation0]]
  $region26: #{tpu_custom_call.1} parent=0
    _
  %s7 = ssub.s32 1, %s5
  %s8 = scalar_select 0, %s7, %s5
  $region1: #{tpu_custom_call.1} parent=0
    #allocation2 [shape = 'u8[1024]{0}', space=vmem, size = 0x400, scoped, tag = 'output window, operand 0, single buffered']
    #allocation3 [shape = 's32[1]{0}', space=sflag, size = 0x4, scoped, tag = 'scoped memory for tpu_custom_call.1']
    %9 = vsyncpa [#allocation3], 0
    // Predicated region
    $region2: #{tpu_custom_call.1} parent=1 // pred_check
      _
    $region3: #{tpu_custom_call.1} parent=1 // pred_check_branch
      %11 = sbr.rel (0) target = $region5
    $region4: #{tpu_custom_call.1} parent=1 // pred_region
      _
    $region5: #{tpu_custom_call.1} parent=1 // pred_fallthru
      _
    // Predicated region
    $region6: #{tpu_custom_call.1} parent=1 // pred_check
      _
    $region7: #{tpu_custom_call.1} parent=1 // pred_check_branch
      %13 = sbr.rel (0) target = $region9
    $region8: #{tpu_custom_call.1} parent=1 // pred_region
      _
    $region9: #{tpu_custom_call.1} parent=1 // pred_fallthru
      _
    // Predicated region
    $region10: #{tpu_custom_call.1} parent=1 // pred_check
      _
    $region11: #{tpu_custom_call.1} parent=1 // pred_check_branch
      %15 = sbr.rel (0) target = $region13
    $region12: #{tpu_custom_call.1} parent=1 // pred_region
      _
    $region13: #{tpu_custom_call.1} parent=1 // pred_fallthru
      _
    // Predicated region
    $region14: #{tpu_custom_call.1} parent=1 // pred_check
      _
    $region15: #{tpu_custom_call.1} parent=1 // pred_check_branch
      %17 = sbr.rel (0) target = $region17
    $region16: #{tpu_custom_call.1} parent=1 // pred_region
      _
    $region17: #{tpu_custom_call.1} parent=1 // pred_fallthru
      _
    %v18 = vld [vmem:[%s0] sm:$0xff]
    %v19 = vld [vmem:[%s0 + $0x8] sm:$0xff]
    %v20 = vld [vmem:[%s0 + $0x10] sm:$0xff]
    %v21 = vld [vmem:[%s0 + $0x18] sm:$0xff]
    %v22 = vld [vmem:[%s0 + $0x20] sm:$0xff]
    %v23 = vld [vmem:[%s0 + $0x28] sm:$0xff]
    %v24 = vld [vmem:[%s0 + $0x30] sm:$0xff]
    %v25 = vld [vmem:[%s0 + $0x38] sm:$0xff]
    %v26 = vld [vmem:[%s0 + $0x40] sm:$0xff]
    %v27 = vld [vmem:[%s0 + $0x48] sm:$0xff]
    %v28 = vld [vmem:[%s0 + $0x50] sm:$0xff]
    %v29 = vld [vmem:[%s0 + $0x58] sm:$0xff]
    %v30 = vld [vmem:[%s0 + $0x60] sm:$0xff]
    %v31 = vld [vmem:[%s0 + $0x68] sm:$0xff]
    %v32 = vld [vmem:[%s0 + $0x70] sm:$0xff]
    %v33 = vld [vmem:[%s0 + $0x78] sm:$0xff]
    %v34 = vld [vmem:[%s0 + $0x80] sm:$0xff]
    %v35 = vld [vmem:[%s0 + $0x88] sm:$0xff]
    %v36 = vld [vmem:[%s0 + $0x90] sm:$0xff]
    %v37 = vld [vmem:[%s0 + $0x98] sm:$0xff]
    %v38 = vld [vmem:[%s0 + $0xa0] sm:$0xff]
    %v39 = vld [vmem:[%s0 + $0xa8] sm:$0xff]
    %v40 = vld [vmem:[%s0 + $0xb0] sm:$0xff]
    %v41 = vld [vmem:[%s0 + $0xb8] sm:$0xff]
    %v42 = vld [vmem:[%s0 + $0xc0] sm:$0xff]
    %v43 = vld [vmem:[%s0 + $0xc8] sm:$0xff]
    %v44 = vld [vmem:[%s0 + $0xd0] sm:$0xff]
    %v45 = vld [vmem:[%s0 + $0xd8] sm:$0xff]
    %v46 = vld [vmem:[%s0 + $0xe0] sm:$0xff]
    %v47 = vld [vmem:[%s0 + $0xe8] sm:$0xff]
    %v48 = vld [vmem:[%s0 + $0xf0] sm:$0xff]
    %v49 = vld [vmem:[%s0 + $0xf8] sm:$0xff]
    %v50 = vld [vmem:[%s1] sm:$0xff]
    %v51 = vld [vmem:[%s1 + $0x8] sm:$0xff]
    %v52 = vld [vmem:[%s1 + $0x10] sm:$0xff]
    %v53 = vld [vmem:[%s1 + $0x18] sm:$0xff]
    %v54 = vld [vmem:[%s1 + $0x20] sm:$0xff]
    %v55 = vld [vmem:[%s1 + $0x28] sm:$0xff]
    %v56 = vld [vmem:[%s1 + $0x30] sm:$0xff]
    %v57 = vld [vmem:[%s1 + $0x38] sm:$0xff]
    %v58 = vld [vmem:[%s1 + $0x40] sm:$0xff]
    %v59 = vld [vmem:[%s1 + $0x48] sm:$0xff]
    %v60 = vld [vmem:[%s1 + $0x50] sm:$0xff]
    %v61 = vld [vmem:[%s1 + $0x58] sm:$0xff]
    %v62 = vld [vmem:[%s1 + $0x60] sm:$0xff]
    %v63 = vld [vmem:[%s1 + $0x68] sm:$0xff]
    %v64 = vld [vmem:[%s1 + $0x70] sm:$0xff]
    %v65 = vld [vmem:[%s1 + $0x78] sm:$0xff]
    %v66 = vld [vmem:[%s1 + $0x80] sm:$0xff]
    %v67 = vld [vmem:[%s1 + $0x88] sm:$0xff]
    %v68 = vld [vmem:[%s1 + $0x90] sm:$0xff]
    %v69 = vld [vmem:[%s1 + $0x98] sm:$0xff]
    %v70 = vld [vmem:[%s1 + $0xa0] sm:$0xff]
    %v71 = vld [vmem:[%s1 + $0xa8] sm:$0xff]
    %v72 = vld [vmem:[%s1 + $0xb0] sm:$0xff]
    %v73 = vld [vmem:[%s1 + $0xb8] sm:$0xff]
    %v74 = vld [vmem:[%s1 + $0xc0] sm:$0xff]
    %v75 = vld [vmem:[%s1 + $0xc8] sm:$0xff]
    %v76 = vld [vmem:[%s1 + $0xd0] sm:$0xff]
    %v77 = vld [vmem:[%s1 + $0xd8] sm:$0xff]
    %v78 = vld [vmem:[%s1 + $0xe0] sm:$0xff]
    %v79 = vld [vmem:[%s1 + $0xe8] sm:$0xff]
    %v80 = vld [vmem:[%s1 + $0xf0] sm:$0xff]
    %v81 = vld [vmem:[%s1 + $0xf8] sm:$0xff]
    %v82 = vld [vmem:[%s2] sm:$0xff]
    %v83 = vld [vmem:[%s2 + $0x8] sm:$0xff]
    %v84 = vld [vmem:[%s3] sm:$0xff]
    %v85 = vld [vmem:[%s3 + $0x8] sm:$0xff]
    %v86 = vld [vmem:[%s3 + $0x10] sm:$0xff]
    %v87 = vlaneseq
    %v88 = vand.u32 %v87, 127
    %89 = vset.pattern.permute.xlu0 0
    %90 = vperm.xlu0 %89, %v18
    %v91 = vpop.permute.xlu0 %90
    %92 = vset.pattern.permute.xlu0 0
    %93 = vperm.xlu0 %92, %v19
    %v94 = vpop.permute.xlu0 %93
    %95 = vset.pattern.permute.xlu0 0
    %96 = vperm.xlu0 %95, %v20
    %v97 = vpop.permute.xlu0 %96
    %98 = vset.pattern.permute.xlu0 0
    %99 = vperm.xlu0 %98, %v21
    %v100 = vpop.permute.xlu0 %99
    %101 = vset.pattern.permute.xlu0 0
    %102 = vperm.xlu0 %101, %v22
    %v103 = vpop.permute.xlu0 %102
    %104 = vset.pattern.permute.xlu0 0
    %105 = vperm.xlu0 %104, %v23
    %v106 = vpop.permute.xlu0 %105
    %107 = vset.pattern.permute.xlu0 0
    %108 = vperm.xlu0 %107, %v24
    %v109 = vpop.permute.xlu0 %108
    %110 = vset.pattern.permute.xlu0 0
    %111 = vperm.xlu0 %110, %v25
    %v112 = vpop.permute.xlu0 %111
    %113 = vset.pattern.permute.xlu0 0
    %114 = vperm.xlu0 %113, %v26
    %v115 = vpop.permute.xlu0 %114
    %116 = vset.pattern.permute.xlu0 0
    %117 = vperm.xlu0 %116, %v27
    %v118 = vpop.permute.xlu0 %117
    %119 = vset.pattern.permute.xlu0 0
    %120 = vperm.xlu0 %119, %v28
    %v121 = vpop.permute.xlu0 %120
    %122 = vset.pattern.permute.xlu0 0
    %123 = vperm.xlu0 %122, %v29
    %v124 = vpop.permute.xlu0 %123
    %125 = vset.pattern.permute.xlu0 0
    %126 = vperm.xlu0 %125, %v30
    %v127 = vpop.permute.xlu0 %126
    %128 = vset.pattern.permute.xlu0 0
    %129 = vperm.xlu0 %128, %v31
    %v130 = vpop.permute.xlu0 %129
    %131 = vset.pattern.permute.xlu0 0
    %132 = vperm.xlu0 %131, %v32
    %v133 = vpop.permute.xlu0 %132
    %134 = vset.pattern.permute.xlu0 0
    %135 = vperm.xlu0 %134, %v33
    %v136 = vpop.permute.xlu0 %135
    %137 = vset.pattern.permute.xlu0 0
    %138 = vperm.xlu0 %137, %v34
    %v139 = vpop.permute.xlu0 %138
    %140 = vset.pattern.permute.xlu0 0
    %141 = vperm.xlu0 %140, %v35
    %v142 = vpop.permute.xlu0 %141
    %143 = vset.pattern.permute.xlu0 0
    %144 = vperm.xlu0 %143, %v36
    %v145 = vpop.permute.xlu0 %144
    %146 = vset.pattern.permute.xlu0 0
    %147 = vperm.xlu0 %146, %v37
    %v148 = vpop.permute.xlu0 %147
    %149 = vset.pattern.permute.xlu0 0
    %150 = vperm.xlu0 %149, %v38
    %v151 = vpop.permute.xlu0 %150
    %152 = vset.pattern.permute.xlu0 0
    %153 = vperm.xlu0 %152, %v39
    %v154 = vpop.permute.xlu0 %153
    %155 = vset.pattern.permute.xlu0 0
    %156 = vperm.xlu0 %155, %v40
    %v157 = vpop.permute.xlu0 %156
    %158 = vset.pattern.permute.xlu0 0
    %159 = vperm.xlu0 %158, %v41
    %v160 = vpop.permute.xlu0 %159
    %161 = vset.pattern.permute.xlu0 0
    %162 = vperm.xlu0 %161, %v42
    %v163 = vpop.permute.xlu0 %162
    %164 = vset.pattern.permute.xlu0 0
    %165 = vperm.xlu0 %164, %v43
    %v166 = vpop.permute.xlu0 %165
    %167 = vset.pattern.permute.xlu0 0
    %168 = vperm.xlu0 %167, %v44
    %v169 = vpop.permute.xlu0 %168
    %170 = vset.pattern.permute.xlu0 0
    %171 = vperm.xlu0 %170, %v45
    %v172 = vpop.permute.xlu0 %171
    %173 = vset.pattern.permute.xlu0 0
    %174 = vperm.xlu0 %173, %v46
    %v175 = vpop.permute.xlu0 %174
    %176 = vset.pattern.permute.xlu0 0
    %177 = vperm.xlu0 %176, %v47
    %v178 = vpop.permute.xlu0 %177
    %179 = vset.pattern.permute.xlu0 0
    %180 = vperm.xlu0 %179, %v48
    %v181 = vpop.permute.xlu0 %180
    %182 = vset.pattern.permute.xlu0 0
    %183 = vperm.xlu0 %182, %v49
    %v184 = vpop.permute.xlu0 %183
    %vm185 = vcmp.eq.s32.totalorder %v88, %v91
    %vm186 = vcmp.eq.s32.totalorder %v88, %v94
    %vm187 = vcmp.eq.s32.totalorder %v88, %v97
    %vm188 = vcmp.eq.s32.totalorder %v88, %v100
    %vm189 = vcmp.eq.s32.totalorder %v88, %v103
    %vm190 = vcmp.eq.s32.totalorder %v88, %v106
    %vm191 = vcmp.eq.s32.totalorder %v88, %v109
    %vm192 = vcmp.eq.s32.totalorder %v88, %v112
    %vm193 = vcmp.eq.s32.totalorder %v88, %v115
    %vm194 = vcmp.eq.s32.totalorder %v88, %v118
    %vm195 = vcmp.eq.s32.totalorder %v88, %v121
    %vm196 = vcmp.eq.s32.totalorder %v88, %v124
    %vm197 = vcmp.eq.s32.totalorder %v88, %v127
    %vm198 = vcmp.eq.s32.totalorder %v88, %v130
    %vm199 = vcmp.eq.s32.totalorder %v88, %v133
    %vm200 = vcmp.eq.s32.totalorder %v88, %v136
    %vm201 = vcmp.eq.s32.totalorder %v88, %v139
    %vm202 = vcmp.eq.s32.totalorder %v88, %v142
    %vm203 = vcmp.eq.s32.totalorder %v88, %v145
    %vm204 = vcmp.eq.s32.totalorder %v88, %v148
    %vm205 = vcmp.eq.s32.totalorder %v88, %v151
    %vm206 = vcmp.eq.s32.totalorder %v88, %v154
    %vm207 = vcmp.eq.s32.totalorder %v88, %v157
    %vm208 = vcmp.eq.s32.totalorder %v88, %v160
    %vm209 = vcmp.eq.s32.totalorder %v88, %v163
    %vm210 = vcmp.eq.s32.totalorder %v88, %v166
    %vm211 = vcmp.eq.s32.totalorder %v88, %v169
    %vm212 = vcmp.eq.s32.totalorder %v88, %v172
    %vm213 = vcmp.eq.s32.totalorder %v88, %v175
    %vm214 = vcmp.eq.s32.totalorder %v88, %v178
    %vm215 = vcmp.eq.s32.totalorder %v88, %v181
    %vm216 = vcmp.eq.s32.totalorder %v88, %v184
    %v217 = vsel %vm185, 1, 0
    %v218 = vsel %vm186, 1, 0
    %v219 = vsel %vm187, 1, 0
    %v220 = vsel %vm188, 1, 0
    %v221 = vsel %vm189, 1, 0
    %v222 = vsel %vm190, 1, 0
    %v223 = vsel %vm191, 1, 0
    %v224 = vsel %vm192, 1, 0
    %v225 = vsel %vm193, 1, 0
    %v226 = vsel %vm194, 1, 0
    %v227 = vsel %vm195, 1, 0
    %v228 = vsel %vm196, 1, 0
    %v229 = vsel %vm197, 1, 0
    %v230 = vsel %vm198, 1, 0
    %v231 = vsel %vm199, 1, 0
    %v232 = vsel %vm200, 1, 0
    %v233 = vsel %vm201, 1, 0
    %v234 = vsel %vm202, 1, 0
    %v235 = vsel %vm203, 1, 0
    %v236 = vsel %vm204, 1, 0
    %v237 = vsel %vm205, 1, 0
    %v238 = vsel %vm206, 1, 0
    %v239 = vsel %vm207, 1, 0
    %v240 = vsel %vm208, 1, 0
    %v241 = vsel %vm209, 1, 0
    %v242 = vsel %vm210, 1, 0
    %v243 = vsel %vm211, 1, 0
    %v244 = vsel %vm212, 1, 0
    %v245 = vsel %vm213, 1, 0
    %v246 = vsel %vm214, 1, 0
    %v247 = vsel %vm215, 1, 0
    %v248 = vsel %vm216, 1, 0
    %v249 = vcvt.s32.f32 %v217
    %v250 = vcvt.s32.f32 %v218
    %v251 = vcvt.s32.f32 %v219
    %v252 = vcvt.s32.f32 %v220
    %v253 = vcvt.s32.f32 %v221
    %v254 = vcvt.s32.f32 %v222
    %v255 = vcvt.s32.f32 %v223
    %v256 = vcvt.s32.f32 %v224
    %v257 = vcvt.s32.f32 %v225
    %v258 = vcvt.s32.f32 %v226
    %v259 = vcvt.s32.f32 %v227
    %v260 = vcvt.s32.f32 %v228
    %v261 = vcvt.s32.f32 %v229
    %v262 = vcvt.s32.f32 %v230
    %v263 = vcvt.s32.f32 %v231
    %v264 = vcvt.s32.f32 %v232
    %v265 = vcvt.s32.f32 %v233
    %v266 = vcvt.s32.f32 %v234
    %v267 = vcvt.s32.f32 %v235
    %v268 = vcvt.s32.f32 %v236
    %v269 = vcvt.s32.f32 %v237
    %v270 = vcvt.s32.f32 %v238
    %v271 = vcvt.s32.f32 %v239
    %v272 = vcvt.s32.f32 %v240
    %v273 = vcvt.s32.f32 %v241
    %v274 = vcvt.s32.f32 %v242
    %v275 = vcvt.s32.f32 %v243
    %v276 = vcvt.s32.f32 %v244
    %v277 = vcvt.s32.f32 %v245
    %v278 = vcvt.s32.f32 %v246
    %v279 = vcvt.s32.f32 %v247
    %v280 = vcvt.s32.f32 %v248
    %281 = vset.pattern.permute.xlu0 0
    %282 = vperm.xlu0 %281, %v50
    %v283 = vpop.permute.xlu0 %282
    %284 = vset.pattern.permute.xlu0 0
    %285 = vperm.xlu0 %284, %v51
    %v286 = vpop.permute.xlu0 %285
    %287 = vset.pattern.permute.xlu0 0
    %288 = vperm.xlu0 %287, %v52
    %v289 = vpop.permute.xlu0 %288
    %290 = vset.pattern.permute.xlu0 0
    %291 = vperm.xlu0 %290, %v53
    %v292 = vpop.permute.xlu0 %291
    %293 = vset.pattern.permute.xlu0 0
    %294 = vperm.xlu0 %293, %v54
    %v295 = vpop.permute.xlu0 %294
    %296 = vset.pattern.permute.xlu0 0
    %297 = vperm.xlu0 %296, %v55
    %v298 = vpop.permute.xlu0 %297
    %299 = vset.pattern.permute.xlu0 0
    %300 = vperm.xlu0 %299, %v56
    %v301 = vpop.permute.xlu0 %300
    %302 = vset.pattern.permute.xlu0 0
    %303 = vperm.xlu0 %302, %v57
    %v304 = vpop.permute.xlu0 %303
    %305 = vset.pattern.permute.xlu0 0
    %306 = vperm.xlu0 %305, %v58
    %v307 = vpop.permute.xlu0 %306
    %308 = vset.pattern.permute.xlu0 0
    %309 = vperm.xlu0 %308, %v59
    %v310 = vpop.permute.xlu0 %309
    %311 = vset.pattern.permute.xlu0 0
    %312 = vperm.xlu0 %311, %v60
    %v313 = vpop.permute.xlu0 %312
    %314 = vset.pattern.permute.xlu0 0
    %315 = vperm.xlu0 %314, %v61
    %v316 = vpop.permute.xlu0 %315
    %317 = vset.pattern.permute.xlu0 0
    %318 = vperm.xlu0 %317, %v62
    %v319 = vpop.permute.xlu0 %318
    %320 = vset.pattern.permute.xlu0 0
    %321 = vperm.xlu0 %320, %v63
    %v322 = vpop.permute.xlu0 %321
    %323 = vset.pattern.permute.xlu0 0
    %324 = vperm.xlu0 %323, %v64
    %v325 = vpop.permute.xlu0 %324
    %326 = vset.pattern.permute.xlu0 0
    %327 = vperm.xlu0 %326, %v65
    %v328 = vpop.permute.xlu0 %327
    %329 = vset.pattern.permute.xlu0 0
    %330 = vperm.xlu0 %329, %v66
    %v331 = vpop.permute.xlu0 %330
    %332 = vset.pattern.permute.xlu0 0
    %333 = vperm.xlu0 %332, %v67
    %v334 = vpop.permute.xlu0 %333
    %335 = vset.pattern.permute.xlu0 0
    %336 = vperm.xlu0 %335, %v68
    %v337 = vpop.permute.xlu0 %336
    %338 = vset.pattern.permute.xlu0 0
    %339 = vperm.xlu0 %338, %v69
    %v340 = vpop.permute.xlu0 %339
    %341 = vset.pattern.permute.xlu0 0
    %342 = vperm.xlu0 %341, %v70
    %v343 = vpop.permute.xlu0 %342
    %344 = vset.pattern.permute.xlu0 0
    %345 = vperm.xlu0 %344, %v71
    %v346 = vpop.permute.xlu0 %345
    %347 = vset.pattern.permute.xlu0 0
    %348 = vperm.xlu0 %347, %v72
    %v349 = vpop.permute.xlu0 %348
    %350 = vset.pattern.permute.xlu0 0
    %351 = vperm.xlu0 %350, %v73
    %v352 = vpop.permute.xlu0 %351
    %353 = vset.pattern.permute.xlu0 0
    %354 = vperm.xlu0 %353, %v74
    %v355 = vpop.permute.xlu0 %354
    %356 = vset.pattern.permute.xlu0 0
    %357 = vperm.xlu0 %356, %v75
    %v358 = vpop.permute.xlu0 %357
    %359 = vset.pattern.permute.xlu0 0
    %360 = vperm.xlu0 %359, %v76
    %v361 = vpop.permute.xlu0 %360
    %362 = vset.pattern.permute.xlu0 0
    %363 = vperm.xlu0 %362, %v77
    %v364 = vpop.permute.xlu0 %363
    %365 = vset.pattern.permute.xlu0 0
    %366 = vperm.xlu0 %365, %v78
    %v367 = vpop.permute.xlu0 %366
    %368 = vset.pattern.permute.xlu0 0
    %369 = vperm.xlu0 %368, %v79
    %v370 = vpop.permute.xlu0 %369
    %371 = vset.pattern.permute.xlu0 0
    %372 = vperm.xlu0 %371, %v80
    %v373 = vpop.permute.xlu0 %372
    %374 = vset.pattern.permute.xlu0 0
    %375 = vperm.xlu0 %374, %v81
    %v376 = vpop.permute.xlu0 %375
    %vm377 = vcmp.eq.s32.totalorder %v88, %v283
    %vm378 = vcmp.eq.s32.totalorder %v88, %v286
    %vm379 = vcmp.eq.s32.totalorder %v88, %v289
    %vm380 = vcmp.eq.s32.totalorder %v88, %v292
    %vm381 = vcmp.eq.s32.totalorder %v88, %v295
    %vm382 = vcmp.eq.s32.totalorder %v88, %v298
    %vm383 = vcmp.eq.s32.totalorder %v88, %v301
    %vm384 = vcmp.eq.s32.totalorder %v88, %v304
    %vm385 = vcmp.eq.s32.totalorder %v88, %v307
    %vm386 = vcmp.eq.s32.totalorder %v88, %v310
    %vm387 = vcmp.eq.s32.totalorder %v88, %v313
    %vm388 = vcmp.eq.s32.totalorder %v88, %v316
    %vm389 = vcmp.eq.s32.totalorder %v88, %v319
    %vm390 = vcmp.eq.s32.totalorder %v88, %v322
    %vm391 = vcmp.eq.s32.totalorder %v88, %v325
    %vm392 = vcmp.eq.s32.totalorder %v88, %v328
    %vm393 = vcmp.eq.s32.totalorder %v88, %v331
    %vm394 = vcmp.eq.s32.totalorder %v88, %v334
    %vm395 = vcmp.eq.s32.totalorder %v88, %v337
    %vm396 = vcmp.eq.s32.totalorder %v88, %v340
    %vm397 = vcmp.eq.s32.totalorder %v88, %v343
    %vm398 = vcmp.eq.s32.totalorder %v88, %v346
    %vm399 = vcmp.eq.s32.totalorder %v88, %v349
    %vm400 = vcmp.eq.s32.totalorder %v88, %v352
    %vm401 = vcmp.eq.s32.totalorder %v88, %v355
    %vm402 = vcmp.eq.s32.totalorder %v88, %v358
    %vm403 = vcmp.eq.s32.totalorder %v88, %v361
    %vm404 = vcmp.eq.s32.totalorder %v88, %v364
    %vm405 = vcmp.eq.s32.totalorder %v88, %v367
    %vm406 = vcmp.eq.s32.totalorder %v88, %v370
    %vm407 = vcmp.eq.s32.totalorder %v88, %v373
    %vm408 = vcmp.eq.s32.totalorder %v88, %v376
    %v409 = vsel %vm377, 1, 0
    %v410 = vsel %vm378, 1, 0
    %v411 = vsel %vm379, 1, 0
    %v412 = vsel %vm380, 1, 0
    %v413 = vsel %vm381, 1, 0
    %v414 = vsel %vm382, 1, 0
    %v415 = vsel %vm383, 1, 0
    %v416 = vsel %vm384, 1, 0
    %v417 = vsel %vm385, 1, 0
    %v418 = vsel %vm386, 1, 0
    %v419 = vsel %vm387, 1, 0
    %v420 = vsel %vm388, 1, 0
    %v421 = vsel %vm389, 1, 0
    %v422 = vsel %vm390, 1, 0
    %v423 = vsel %vm391, 1, 0
    %v424 = vsel %vm392, 1, 0
    %v425 = vsel %vm393, 1, 0
    %v426 = vsel %vm394, 1, 0
    %v427 = vsel %vm395, 1, 0
    %v428 = vsel %vm396, 1, 0
    %v429 = vsel %vm397, 1, 0
    %v430 = vsel %vm398, 1, 0
    %v431 = vsel %vm399, 1, 0
    %v432 = vsel %vm400, 1, 0
    %v433 = vsel %vm401, 1, 0
    %v434 = vsel %vm402, 1, 0
    %v435 = vsel %vm403, 1, 0
    %v436 = vsel %vm404, 1, 0
    %v437 = vsel %vm405, 1, 0
    %v438 = vsel %vm406, 1, 0
    %v439 = vsel %vm407, 1, 0
    %v440 = vsel %vm408, 1, 0
    %v441 = vcvt.s32.f32 %v409
    %v442 = vcvt.s32.f32 %v410
    %v443 = vcvt.s32.f32 %v411
    %v444 = vcvt.s32.f32 %v412
    %v445 = vcvt.s32.f32 %v413
    %v446 = vcvt.s32.f32 %v414
    %v447 = vcvt.s32.f32 %v415
    %v448 = vcvt.s32.f32 %v416
    %v449 = vcvt.s32.f32 %v417
    %v450 = vcvt.s32.f32 %v418
    %v451 = vcvt.s32.f32 %v419
    %v452 = vcvt.s32.f32 %v420
    %v453 = vcvt.s32.f32 %v421
    %v454 = vcvt.s32.f32 %v422
    %v455 = vcvt.s32.f32 %v423
    %v456 = vcvt.s32.f32 %v424
    %v457 = vcvt.s32.f32 %v425
    %v458 = vcvt.s32.f32 %v426
    %v459 = vcvt.s32.f32 %v427
    %v460 = vcvt.s32.f32 %v428
    %v461 = vcvt.s32.f32 %v429
    %v462 = vcvt.s32.f32 %v430
    %v463 = vcvt.s32.f32 %v431
    %v464 = vcvt.s32.f32 %v432
    %v465 = vcvt.s32.f32 %v433
    %v466 = vcvt.s32.f32 %v434
    %v467 = vcvt.s32.f32 %v435
    %v468 = vcvt.s32.f32 %v436
    %v469 = vcvt.s32.f32 %v437
    %v470 = vcvt.s32.f32 %v438
    %v471 = vcvt.s32.f32 %v439
    %v472 = vcvt.s32.f32 %v440
    %vm473 = vcmask 130048
    %v475 = vsel %vm473, %v249, 0
    %v478 = vsel %vm473, %v250, 0
    %v481 = vsel %vm473, %v251, 0
    %v484 = vsel %vm473, %v252, 0
    %v487 = vsel %vm473, %v253, 0
    %v490 = vsel %vm473, %v254, 0
    %v493 = vsel %vm473, %v255, 0
    %v496 = vsel %vm473, %v256, 0
    %v499 = vsel %vm473, %v257, 0
    %v502 = vsel %vm473, %v258, 0
    %v505 = vsel %vm473, %v259, 0
    %v508 = vsel %vm473, %v260, 0
    %v511 = vsel %vm473, %v261, 0
    %v514 = vsel %vm473, %v262, 0
    %v517 = vsel %vm473, %v263, 0
    %v520 = vsel %vm473, %v264, 0
    %v523 = vsel %vm473, %v265, 0
    %v526 = vsel %vm473, %v266, 0
    %v529 = vsel %vm473, %v267, 0
    %v532 = vsel %vm473, %v268, 0
    %v535 = vsel %vm473, %v269, 0
    %v538 = vsel %vm473, %v270, 0
    %v541 = vsel %vm473, %v271, 0
    %v544 = vsel %vm473, %v272, 0
    %v547 = vsel %vm473, %v273, 0
    %v550 = vsel %vm473, %v274, 0
    %v553 = vsel %vm473, %v275, 0
    %v556 = vsel %vm473, %v276, 0
    %v559 = vsel %vm473, %v277, 0
    %v562 = vsel %vm473, %v278, 0
    %v565 = vsel %vm473, %v279, 0
    %v568 = vsel %vm473, %v280, 0
    %570 = vmatpush.msra.mxu0 0.0
    %571 = vmatpush.msra.mxu0 0.0
    %572 = vmatpush.msra.mxu0 0.0
    %573 = vmatpush.msra.mxu0 0.0
    %574 = vmatpush.msra.mxu0 0.0
    %575 = vmatpush.msra.mxu0 0.0
    %576 = vmatpush.msra.mxu0 0.0
    %577 = vmatpush.msra.mxu0 0.0
    %578 = vmatpush.msra.mxu0 0.0
    %579 = vmatpush.msra.mxu0 0.0
    %580 = vmatpush.msra.mxu0 0.0
    %581 = vmatpush.msra.mxu0 0.0
    %582 = vmatpush.msra.mxu0 0.0
    %583 = vmatpush.msra.mxu0 0.0
    %584 = vmatpush.msra.mxu0 %v83
    %585 = vmatpush.msra.mxu0 %v82
    %586 = vmatmul.f32.gmra.mxu0 %v475
    %v587 = vpop.f32.mrf.mxu0
    %v588 = vadd.f32 0.0, %v587
    %589 = vmatmul.f32.gmra.mxu0 %v478
    %v590 = vpop.f32.mrf.mxu0
    %v591 = vadd.f32 0.0, %v590
    %592 = vmatmul.f32.gmra.mxu0 %v481
    %v593 = vpop.f32.mrf.mxu0
    %v594 = vadd.f32 0.0, %v593
    %595 = vmatmul.f32.gmra.mxu0 %v484
    %v596 = vpop.f32.mrf.mxu0
    %v597 = vadd.f32 0.0, %v596
    %598 = vmatmul.f32.gmra.mxu0 %v487
    %v599 = vpop.f32.mrf.mxu0
    %v600 = vadd.f32 0.0, %v599
    %601 = vmatmul.f32.gmra.mxu0 %v490
    %v602 = vpop.f32.mrf.mxu0
    %v603 = vadd.f32 0.0, %v602
    %604 = vmatmul.f32.gmra.mxu0 %v493
    %v605 = vpop.f32.mrf.mxu0
    %v606 = vadd.f32 0.0, %v605
    %607 = vmatmul.f32.gmra.mxu0 %v496
    %v608 = vpop.f32.mrf.mxu0
    %v609 = vadd.f32 0.0, %v608
    %610 = vmatmul.f32.gmra.mxu0 %v499
    %v611 = vpop.f32.mrf.mxu0
    %v612 = vadd.f32 0.0, %v611
    %613 = vmatmul.f32.gmra.mxu0 %v502
    %v614 = vpop.f32.mrf.mxu0
    %v615 = vadd.f32 0.0, %v614
    %616 = vmatmul.f32.gmra.mxu0 %v505
    %v617 = vpop.f32.mrf.mxu0
    %v618 = vadd.f32 0.0, %v617
    %619 = vmatmul.f32.gmra.mxu0 %v508
    %v620 = vpop.f32.mrf.mxu0
    %v621 = vadd.f32 0.0, %v620
    %622 = vmatmul.f32.gmra.mxu0 %v511
    %v623 = vpop.f32.mrf.mxu0
    %v624 = vadd.f32 0.0, %v623
    %625 = vmatmul.f32.gmra.mxu0 %v514
    %v626 = vpop.f32.mrf.mxu0
    %v627 = vadd.f32 0.0, %v626
    %628 = vmatmul.f32.gmra.mxu0 %v517
    %v629 = vpop.f32.mrf.mxu0
    %v630 = vadd.f32 0.0, %v629
    %631 = vmatmul.f32.gmra.mxu0 %v520
    %v632 = vpop.f32.mrf.mxu0
    %v633 = vadd.f32 0.0, %v632
    %634 = vmatmul.f32.gmra.mxu0 %v523
    %v635 = vpop.f32.mrf.mxu0
    %v636 = vadd.f32 0.0, %v635
    %637 = vmatmul.f32.gmra.mxu0 %v526
    %v638 = vpop.f32.mrf.mxu0
    %v639 = vadd.f32 0.0, %v638
    %640 = vmatmul.f32.gmra.mxu0 %v529
    %v641 = vpop.f32.mrf.mxu0
    %v642 = vadd.f32 0.0, %v641
    %643 = vmatmul.f32.gmra.mxu0 %v532
    %v644 = vpop.f32.mrf.mxu0
    %v645 = vadd.f32 0.0, %v644
    %646 = vmatmul.f32.gmra.mxu0 %v535
    %v647 = vpop.f32.mrf.mxu0
    %v648 = vadd.f32 0.0, %v647
    %649 = vmatmul.f32.gmra.mxu0 %v538
    %v650 = vpop.f32.mrf.mxu0
    %v651 = vadd.f32 0.0, %v650
    %652 = vmatmul.f32.gmra.mxu0 %v541
    %v653 = vpop.f32.mrf.mxu0
    %v654 = vadd.f32 0.0, %v653
    %655 = vmatmul.f32.gmra.mxu0 %v544
    %v656 = vpop.f32.mrf.mxu0
    %v657 = vadd.f32 0.0, %v656
    %658 = vmatmul.f32.gmra.mxu0 %v547
    %v659 = vpop.f32.mrf.mxu0
    %v660 = vadd.f32 0.0, %v659
    %661 = vmatmul.f32.gmra.mxu0 %v550
    %v662 = vpop.f32.mrf.mxu0
    %v663 = vadd.f32 0.0, %v662
    %664 = vmatmul.f32.gmra.mxu0 %v553
    %v665 = vpop.f32.mrf.mxu0
    %v666 = vadd.f32 0.0, %v665
    %667 = vmatmul.f32.gmra.mxu0 %v556
    %v668 = vpop.f32.mrf.mxu0
    %v669 = vadd.f32 0.0, %v668
    %670 = vmatmul.f32.gmra.mxu0 %v559
    %v671 = vpop.f32.mrf.mxu0
    %v672 = vadd.f32 0.0, %v671
    %673 = vmatmul.f32.gmra.mxu0 %v562
    %v674 = vpop.f32.mrf.mxu0
    %v675 = vadd.f32 0.0, %v674
    %676 = vmatmul.f32.gmra.mxu0 %v565
    %v677 = vpop.f32.mrf.mxu0
    %v678 = vadd.f32 0.0, %v677
    %679 = vmatmul.f32.gmra.mxu0 %v568
    %v680 = vpop.f32.mrf.mxu0
    %v681 = vadd.f32 0.0, %v680
    %682 = vdwg.mxu0
    %vm683 = vcmask 195584
    %v685 = vsel %vm683, %v441, 0
    %v688 = vsel %vm683, %v442, 0
    %v691 = vsel %vm683, %v443, 0
    %v694 = vsel %vm683, %v444, 0
    %v697 = vsel %vm683, %v445, 0
    %v700 = vsel %vm683, %v446, 0
    %v703 = vsel %vm683, %v447, 0
    %v706 = vsel %vm683, %v448, 0
    %v709 = vsel %vm683, %v449, 0
    %v712 = vsel %vm683, %v450, 0
    %v715 = vsel %vm683, %v451, 0
    %v718 = vsel %vm683, %v452, 0
    %v721 = vsel %vm683, %v453, 0
    %v724 = vsel %vm683, %v454, 0
    %v727 = vsel %vm683, %v455, 0
    %v730 = vsel %vm683, %v456, 0
    %v733 = vsel %vm683, %v457, 0
    %v736 = vsel %vm683, %v458, 0
    %v739 = vsel %vm683, %v459, 0
    %v742 = vsel %vm683, %v460, 0
    %v745 = vsel %vm683, %v461, 0
    %v748 = vsel %vm683, %v462, 0
    %v751 = vsel %vm683, %v463, 0
    %v754 = vsel %vm683, %v464, 0
    %v757 = vsel %vm683, %v465, 0
    %v760 = vsel %vm683, %v466, 0
    %v763 = vsel %vm683, %v467, 0
    %v766 = vsel %vm683, %v468, 0
    %v769 = vsel %vm683, %v469, 0
    %v772 = vsel %vm683, %v470, 0
    %v775 = vsel %vm683, %v471, 0
    %v778 = vsel %vm683, %v472, 0
    %780 = vmatpush.msra.mxu0 0.0
    %781 = vmatpush.msra.mxu0 0.0
    %782 = vmatpush.msra.mxu0 0.0
    %783 = vmatpush.msra.mxu0 0.0
    %784 = vmatpush.msra.mxu0 0.0
    %785 = vmatpush.msra.mxu0 0.0
    %786 = vmatpush.msra.mxu0 0.0
    %787 = vmatpush.msra.mxu0 0.0
    %788 = vmatpush.msra.mxu0 0.0
    %789 = vmatpush.msra.mxu0 0.0
    %790 = vmatpush.msra.mxu0 0.0
    %791 = vmatpush.msra.mxu0 0.0
    %792 = vmatpush.msra.mxu0 0.0
    %793 = vmatpush.msra.mxu0 %v86
    %794 = vmatpush.msra.mxu0 %v85
    %795 = vmatpush.msra.mxu0 %v84
    %796 = vmatmul.f32.gmra.mxu0 %v685
    %v797 = vpop.f32.mrf.mxu0
    %v798 = vadd.f32 0.0, %v797
    %799 = vmatmul.f32.gmra.mxu0 %v688
    %v800 = vpop.f32.mrf.mxu0
    %v801 = vadd.f32 0.0, %v800
    %802 = vmatmul.f32.gmra.mxu0 %v691
    %v803 = vpop.f32.mrf.mxu0
    %v804 = vadd.f32 0.0, %v803
    %805 = vmatmul.f32.gmra.mxu0 %v694
    %v806 = vpop.f32.mrf.mxu0
    %v807 = vadd.f32 0.0, %v806
    %808 = vmatmul.f32.gmra.mxu0 %v697
    %v809 = vpop.f32.mrf.mxu0
    %v810 = vadd.f32 0.0, %v809
    %811 = vmatmul.f32.gmra.mxu0 %v700
    %v812 = vpop.f32.mrf.mxu0
    %v813 = vadd.f32 0.0, %v812
    %814 = vmatmul.f32.gmra.mxu0 %v703
    %v815 = vpop.f32.mrf.mxu0
    %v816 = vadd.f32 0.0, %v815
    %817 = vmatmul.f32.gmra.mxu0 %v706
    %v818 = vpop.f32.mrf.mxu0
    %v819 = vadd.f32 0.0, %v818
    %820 = vmatmul.f32.gmra.mxu0 %v709
    %v821 = vpop.f32.mrf.mxu0
    %v822 = vadd.f32 0.0, %v821
    %823 = vmatmul.f32.gmra.mxu0 %v712
    %v824 = vpop.f32.mrf.mxu0
    %v825 = vadd.f32 0.0, %v824
    %826 = vmatmul.f32.gmra.mxu0 %v715
    %v827 = vpop.f32.mrf.mxu0
    %v828 = vadd.f32 0.0, %v827
    %829 = vmatmul.f32.gmra.mxu0 %v718
    %v830 = vpop.f32.mrf.mxu0
    %v831 = vadd.f32 0.0, %v830
    %832 = vmatmul.f32.gmra.mxu0 %v721
    %v833 = vpop.f32.mrf.mxu0
    %v834 = vadd.f32 0.0, %v833
    %835 = vmatmul.f32.gmra.mxu0 %v724
    %v836 = vpop.f32.mrf.mxu0
    %v837 = vadd.f32 0.0, %v836
    %838 = vmatmul.f32.gmra.mxu0 %v727
    %v839 = vpop.f32.mrf.mxu0
    %v840 = vadd.f32 0.0, %v839
    %841 = vmatmul.f32.gmra.mxu0 %v730
    %v842 = vpop.f32.mrf.mxu0
    %v843 = vadd.f32 0.0, %v842
    %844 = vmatmul.f32.gmra.mxu0 %v733
    %v845 = vpop.f32.mrf.mxu0
    %v846 = vadd.f32 0.0, %v845
    %847 = vmatmul.f32.gmra.mxu0 %v736
    %v848 = vpop.f32.mrf.mxu0
    %v849 = vadd.f32 0.0, %v848
    %850 = vmatmul.f32.gmra.mxu0 %v739
    %v851 = vpop.f32.mrf.mxu0
    %v852 = vadd.f32 0.0, %v851
    %853 = vmatmul.f32.gmra.mxu0 %v742
    %v854 = vpop.f32.mrf.mxu0
    %v855 = vadd.f32 0.0, %v854
    %856 = vmatmul.f32.gmra.mxu0 %v745
    %v857 = vpop.f32.mrf.mxu0
    %v858 = vadd.f32 0.0, %v857
    %859 = vmatmul.f32.gmra.mxu0 %v748
    %v860 = vpop.f32.mrf.mxu0
    %v861 = vadd.f32 0.0, %v860
    %862 = vmatmul.f32.gmra.mxu0 %v751
    %v863 = vpop.f32.mrf.mxu0
    %v864 = vadd.f32 0.0, %v863
    %865 = vmatmul.f32.gmra.mxu0 %v754
    %v866 = vpop.f32.mrf.mxu0
    %v867 = vadd.f32 0.0, %v866
    %868 = vmatmul.f32.gmra.mxu0 %v757
    %v869 = vpop.f32.mrf.mxu0
    %v870 = vadd.f32 0.0, %v869
    %871 = vmatmul.f32.gmra.mxu0 %v760
    %v872 = vpop.f32.mrf.mxu0
    %v873 = vadd.f32 0.0, %v872
    %874 = vmatmul.f32.gmra.mxu0 %v763
    %v875 = vpop.f32.mrf.mxu0
    %v876 = vadd.f32 0.0, %v875
    %877 = vmatmul.f32.gmra.mxu0 %v766
    %v878 = vpop.f32.mrf.mxu0
    %v879 = vadd.f32 0.0, %v878
    %880 = vmatmul.f32.gmra.mxu0 %v769
    %v881 = vpop.f32.mrf.mxu0
    %v882 = vadd.f32 0.0, %v881
    %883 = vmatmul.f32.gmra.mxu0 %v772
    %v884 = vpop.f32.mrf.mxu0
    %v885 = vadd.f32 0.0, %v884
    %886 = vmatmul.f32.gmra.mxu0 %v775
    %v887 = vpop.f32.mrf.mxu0
    %v888 = vadd.f32 0.0, %v887
    %889 = vmatmul.f32.gmra.mxu0 %v778
    %v890 = vpop.f32.mrf.mxu0
    %v891 = vadd.f32 0.0, %v890
    %892 = vdwg.mxu0
    %v893 = vmul.f32 %v588, %v798
    %v894 = vmul.f32 %v591, %v801
    %v895 = vmul.f32 %v594, %v804
    %v896 = vmul.f32 %v597, %v807
    %v897 = vmul.f32 %v600, %v810
    %v898 = vmul.f32 %v603, %v813
    %v899 = vmul.f32 %v606, %v816
    %v900 = vmul.f32 %v609, %v819
    %v901 = vmul.f32 %v612, %v822
    %v902 = vmul.f32 %v615, %v825
    %v903 = vmul.f32 %v618, %v828
    %v904 = vmul.f32 %v621, %v831
    %v905 = vmul.f32 %v624, %v834
    %v906 = vmul.f32 %v627, %v837
    %v907 = vmul.f32 %v630, %v840
    %v908 = vmul.f32 %v633, %v843
    %v909 = vmul.f32 %v636, %v846
    %v910 = vmul.f32 %v639, %v849
    %v911 = vmul.f32 %v642, %v852
    %v912 = vmul.f32 %v645, %v855
    %v913 = vmul.f32 %v648, %v858
    %v914 = vmul.f32 %v651, %v861
    %v915 = vmul.f32 %v654, %v864
    %v916 = vmul.f32 %v657, %v867
    %v917 = vmul.f32 %v660, %v870
    %v918 = vmul.f32 %v663, %v873
    %v919 = vmul.f32 %v666, %v876
    %v920 = vmul.f32 %v669, %v879
    %v921 = vmul.f32 %v672, %v882
    %v922 = vmul.f32 %v675, %v885
    %v923 = vmul.f32 %v678, %v888
    %v924 = vmul.f32 %v681, %v891
    %925 = vadd.xlane.f32.xlu0 %v893
    %v926 = vpop.xlane.xlu0 %925
    %927 = vadd.xlane.f32.xlu0 %v894
    %v928 = vpop.xlane.xlu0 %927
    %929 = vadd.xlane.f32.xlu0 %v895
    %v930 = vpop.xlane.xlu0 %929
    %931 = vadd.xlane.f32.xlu0 %v896
    %v932 = vpop.xlane.xlu0 %931
    %933 = vadd.xlane.f32.xlu0 %v897
    %v934 = vpop.xlane.xlu0 %933
    %935 = vadd.xlane.f32.xlu0 %v898
    %v936 = vpop.xlane.xlu0 %935
    %937 = vadd.xlane.f32.xlu0 %v899
    %v938 = vpop.xlane.xlu0 %937
    %939 = vadd.xlane.f32.xlu0 %v900
    %v940 = vpop.xlane.xlu0 %939
    %941 = vadd.xlane.f32.xlu0 %v901
    %v942 = vpop.xlane.xlu0 %941
    %943 = vadd.xlane.f32.xlu0 %v902
    %v944 = vpop.xlane.xlu0 %943
    %945 = vadd.xlane.f32.xlu0 %v903
    %v946 = vpop.xlane.xlu0 %945
    %947 = vadd.xlane.f32.xlu0 %v904
    %v948 = vpop.xlane.xlu0 %947
    %949 = vadd.xlane.f32.xlu0 %v905
    %v950 = vpop.xlane.xlu0 %949
    %951 = vadd.xlane.f32.xlu0 %v906
    %v952 = vpop.xlane.xlu0 %951
    %953 = vadd.xlane.f32.xlu0 %v907
    %v954 = vpop.xlane.xlu0 %953
    %955 = vadd.xlane.f32.xlu0 %v908
    %v956 = vpop.xlane.xlu0 %955
    %957 = vadd.xlane.f32.xlu0 %v909
    %v958 = vpop.xlane.xlu0 %957
    %959 = vadd.xlane.f32.xlu0 %v910
    %v960 = vpop.xlane.xlu0 %959
    %961 = vadd.xlane.f32.xlu0 %v911
    %v962 = vpop.xlane.xlu0 %961
    %963 = vadd.xlane.f32.xlu0 %v912
    %v964 = vpop.xlane.xlu0 %963
    %965 = vadd.xlane.f32.xlu0 %v913
    %v966 = vpop.xlane.xlu0 %965
    %967 = vadd.xlane.f32.xlu0 %v914
    %v968 = vpop.xlane.xlu0 %967
    %969 = vadd.xlane.f32.xlu0 %v915
    %v970 = vpop.xlane.xlu0 %969
    %971 = vadd.xlane.f32.xlu0 %v916
    %v972 = vpop.xlane.xlu0 %971
    %973 = vadd.xlane.f32.xlu0 %v917
    %v974 = vpop.xlane.xlu0 %973
    %975 = vadd.xlane.f32.xlu0 %v918
    %v976 = vpop.xlane.xlu0 %975
    %977 = vadd.xlane.f32.xlu0 %v919
    %v978 = vpop.xlane.xlu0 %977
    %979 = vadd.xlane.f32.xlu0 %v920
    %v980 = vpop.xlane.xlu0 %979
    %981 = vadd.xlane.f32.xlu0 %v921
    %v982 = vpop.xlane.xlu0 %981
    %983 = vadd.xlane.f32.xlu0 %v922
    %v984 = vpop.xlane.xlu0 %983
    %985 = vadd.xlane.f32.xlu0 %v923
    %v986 = vpop.xlane.xlu0 %985
    %987 = vadd.xlane.f32.xlu0 %v924
    %v988 = vpop.xlane.xlu0 %987
    %989 = vxpose.xlu0.b32.start [1/16] %v926, 128
    %990 = vxpose.xlu0.b32.cont [2/16] %v928, 128
    %991 = vxpose.xlu0.b32.cont [3/16] %v930, 128
    %992 = vxpose.xlu0.b32.cont [4/16] %v932, 128
    %993 = vxpose.xlu0.b32.cont [5/16] %v934, 128
    %994 = vxpose.xlu0.b32.cont [6/16] %v936, 128
    %995 = vxpose.xlu0.b32.cont [7/16] %v938, 128
    %996 = vxpose.xlu0.b32.cont [8/16] %v940, 128
    %997 = vxpose.xlu0.b32.cont [9/16] %v942, 128
    %998 = vxpose.xlu0.b32.cont [10/16] %v944, 128
    %999 = vxpose.xlu0.b32.cont [11/16] %v946, 128
    %1000 = vxpose.xlu0.b32.cont [12/16] %v948, 128
    %1001 = vxpose.xlu0.b32.cont [13/16] %v950, 128
    %1002 = vxpose.xlu0.b32.cont [14/16] %v952, 128
    %1003 = vxpose.xlu0.b32.cont [15/16] %v954, 128
    %1004 = vxpose.xlu0.b32.end [16/16] %v956, 128
    %v1005 = vpop.trf.xlu0
    %v1006 = vpop.trf.xlu0
    %v1007 = vpop.trf.xlu0
    %v1008 = vpop.trf.xlu0
    %v1009 = vpop.trf.xlu0
    %v1010 = vpop.trf.xlu0
    %v1011 = vpop.trf.xlu0
    %v1012 = vpop.trf.xlu0
    %v1013 = vpop.trf.xlu0
    %v1014 = vpop.trf.xlu0
    %v1015 = vpop.trf.xlu0
    %v1016 = vpop.trf.xlu0
    %v1017 = vpop.trf.xlu0
    %v1018 = vpop.trf.xlu0
    %v1019 = vpop.trf.xlu0
    %v1020 = vpop.trf.xlu0
    %1021 = vxpose.xlu0.b32.start [1/16] %v958, 128
    %1022 = vxpose.xlu0.b32.cont [2/16] %v960, 128
    %1023 = vxpose.xlu0.b32.cont [3/16] %v962, 128
    %1024 = vxpose.xlu0.b32.cont [4/16] %v964, 128
    %1025 = vxpose.xlu0.b32.cont [5/16] %v966, 128
    %1026 = vxpose.xlu0.b32.cont [6/16] %v968, 128
    %1027 = vxpose.xlu0.b32.cont [7/16] %v970, 128
    %1028 = vxpose.xlu0.b32.cont [8/16] %v972, 128
    %1029 = vxpose.xlu0.b32.cont [9/16] %v974, 128
    %1030 = vxpose.xlu0.b32.cont [10/16] %v976, 128
    %1031 = vxpose.xlu0.b32.cont [11/16] %v978, 128
    %1032 = vxpose.xlu0.b32.cont [12/16] %v980, 128
    %1033 = vxpose.xlu0.b32.cont [13/16] %v982, 128
    %1034 = vxpose.xlu0.b32.cont [14/16] %v984, 128
    %1035 = vxpose.xlu0.b32.cont [15/16] %v986, 128
    %1036 = vxpose.xlu0.b32.end [16/16] %v988, 128
    %v1037 = vpop.trf.xlu0
    %v1038 = vpop.trf.xlu0
    %v1039 = vpop.trf.xlu0
    %v1040 = vpop.trf.xlu0
    %v1041 = vpop.trf.xlu0
    %v1042 = vpop.trf.xlu0
    %v1043 = vpop.trf.xlu0
    %v1044 = vpop.trf.xlu0
    %v1045 = vpop.trf.xlu0
    %v1046 = vpop.trf.xlu0
    %v1047 = vpop.trf.xlu0
    %v1048 = vpop.trf.xlu0
    %v1049 = vpop.trf.xlu0
    %v1050 = vpop.trf.xlu0
    %v1051 = vpop.trf.xlu0
    %v1052 = vpop.trf.xlu0
    %v1055 = vrot.slane %v1037, 7
    %vm1056 = vcmask 1040384
    %v1057 = vsel %vm1056, %v1005, %v1055
    %v1059 = vlaneseq
    %vm1060 = vcmp.ge.s32.totalorder %v1059, 0
    %vm1061 = vcmp.lt.s32.totalorder %v1059, 256
    %vm1062 = vmand %vm1060, %vm1061
    %1063 = vst.msk [vmem:[#allocation2] sm:$0x3] %vm1062, %v1057
    // Predicated region
    $region18: #{tpu_custom_call.1} parent=1 // pred_check
      _
    $region19: #{tpu_custom_call.1} parent=1 // pred_check_branch
      %1065 = sbr.rel (0) target = $region21
    $region20: #{tpu_custom_call.1} parent=1 // pred_region
      %1067 = vsyncadd [#allocation3], 0
      %s1069 = sshll.u32 [#allocation2], 4
      %s1070 = int_to_ptr.vmem [resolvable:$true] %s1069
      %s1071 = sshll.u32 %s4, 4
      %s1072 = int_to_ptr.hbm [resolvable:$true] %s1071
      %1074 = dma.vmem_to_hbm [thread:$0]  %s1070, 32, %s1072, [#allocation3]
    $region21: #{tpu_custom_call.1} parent=1 // pred_fallthru
      _
    // Predicated region
    $region22: #{tpu_custom_call.1} parent=1 // pred_check
      _
    $region23: #{tpu_custom_call.1} parent=1 // pred_check_branch
      %1076 = sbr.rel (0) target = $region25
    $region24: #{tpu_custom_call.1} parent=1 // pred_region
      %1078 = dma.done [#allocation3], 32
    $region25: #{tpu_custom_call.1} parent=1 // pred_fallthru
      _
    %1079 = vsyncpa [#allocation3], 1

</llo_original>
